<compile_context>
chip_gen: v7x
topology: tpu7x:2x2x1
jax: 0.10.0
libtpu: 0.0.40
codegen_flags: <defaults>
</compile_context>

<pallas_src>
import functools
import math

import jax
import jax.numpy as jnp
from jax.experimental import pallas as pl
from jax.experimental.pallas import tpu as pltpu

CHN_MID = 32
EPS = 0.1


def _auto_tile_and_vmem():
    """Per-generation defaults: 64K-lane tiles on 128-MiB-VMEM parts (v5e/v6e),
    32K-lane tiles + 48 MiB scoped limit on 64-MiB parts (v7x)."""
    max_tile, vmem_bytes = 32768, 48 * 1024 * 1024
    try:
        if pltpu.get_tpu_info().vmem_capacity_bytes > 64 * 1024 * 1024:
            max_tile, vmem_bytes = 65536, 64 * 1024 * 1024
    except Exception:
        pass
    return max_tile, vmem_bytes


def _bce_ranking_kernel(x_ref, w1_ref, w2_ref, b2_ref, w3_ref, b3_ref,
                        out_ref, acc_ref,
                        *, total_pixels, tile_p, tiles_per_core, has_pad):
    c = pl.program_id(0)          # core-split axis ("parallel")
    j = pl.program_id(1)          # pixel-tile axis ("arbitrary")

    @pl.when(j == 0)
    def _init():
        acc_ref[...] = jnp.zeros_like(acc_ref)

    x = x_ref[...]                # (3, TP) f32: rows = d0, d1, judge
    d01 = x[0:2, :]               # (2, TP)
    d0 = x[0:1, :]
    d1 = x[1:2, :]
    judge = x[2:3, :]

    # Ratio features: both reciprocals in one dense (2, TP) EUP pass.
    inv = pl.reciprocal(d01 + EPS, approx=True)      # [1/(d1_eps) at row1, 1/(d0_eps) at row0]
    f3 = d0 * inv[1:2, :]                            # d0 / (d1 + eps)
    f4 = d1 * inv[0:1, :]                            # d1 / (d0 + eps)

    # (8, TP) bf16 MXU operand built as a value; row 5 = 1.0 picks up b1 from w1p.
    feats = jnp.concatenate(
        [d01, d0 - d1, f3, f4,
         jnp.ones((1, tile_p), jnp.float32),
         jnp.zeros((2, tile_p), jnp.float32)],
        axis=0).astype(jnp.bfloat16)

    # Layer 1: 1x1 conv 5->32 on the MXU, b1 folded in; fused LeakyReLU + bf16 downcast.
    a1 = jnp.dot(w1_ref[...], feats, preferred_element_type=jnp.float32)        # (32, TP)
    h1 = jnp.maximum(a1, 0.2 * a1).astype(jnp.bfloat16)

    # Layer 2: 1x1 conv 32->32.
    a2 = jnp.dot(w2_ref[...], h1, preferred_element_type=jnp.float32) + b2_ref[...]
    h2 = jnp.maximum(a2, 0.2 * a2).astype(jnp.bfloat16)

    # Layer 3: 1x1 conv 32->1 -> logit.
    logit = jnp.dot(w3_ref[...], h2, preferred_element_type=jnp.float32) + b3_ref[...]  # (1, TP)

    # BCE(sigmoid(logit), per) in logits form: softplus(logit) - per*logit (stable).
    per = (judge + 1.0) * 0.5
    softplus = jnp.maximum(logit, 0.0) + jnp.log(1.0 + jnp.exp(-jnp.abs(logit)))
    bce = softplus - per * logit                                                  # (1, TP)

    acc_ref[...] = acc_ref[...] + jnp.sum(bce, keepdims=True)

    if has_pad:
        # Subtract the contribution of padded lanes; only runs on tiles that have any.
        gt = c * tiles_per_core + j            # global tile index
        @pl.when((gt + 1) * tile_p > total_pixels)
        def _mask_correct():
            lane = jax.lax.broadcasted_iota(jnp.int32, (1, tile_p), 1)
            invalid = (gt * tile_p + lane) >= total_pixels
            acc_ref[...] = acc_ref[...] - jnp.sum(
                jnp.where(invalid, bce, 0.0), keepdims=True)

    @pl.when(j == pl.num_programs(1) - 1)
    def _finalize():
        out_ref[...] = jnp.broadcast_to(acc_ref[...], out_ref.shape)


def bce_ranking_loss(d0, d1, judge, params, *, max_tile=None):
    """d0, d1, judge: NCHW float32 tensors of identical shape (e.g. (N, 1, H, W))."""
    w1, b1, w2, b2, w3, b3 = params
    chn = w2.shape[0]
    P = d0.size

    auto_tile, vmem_bytes = _auto_tile_and_vmem()
    if max_tile is None:
        max_tile = auto_tile

    # Tile size: multiple of 128 lanes, capped at max_tile.
    p_ru = ((P + 127) // 128) * 128
    tp = max(128, (min(max_tile, p_ru) // 128) * 128)
    num_tiles = (P + tp - 1) // tp

    # 2-way core split (per-core partial sums); collapses to 1 when there is one tile.
    ncs = 2 if num_tiles >= 2 else 1
    tiles_per_core = (num_tiles + ncs - 1) // ncs
    total_tiles = ncs * tiles_per_core
    p_pad = total_tiles * tp
    has_pad = p_pad != P

    # Single stacked (3, P_pad) input: rows = d0, d1, judge.
    x = jnp.stack([d0.reshape(P), d1.reshape(P), judge.reshape(P)],
                  axis=0).astype(jnp.float32)
    if has_pad:
        x = jnp.pad(x, ((0, 0), (0, p_pad - P)))

    # Weights: bf16 MXU operands. w1 zero-padded 5 -> 8 contraction with b1 in column 5.
    w1p = jnp.concatenate(
        [w1.astype(jnp.float32),
         b1.reshape(chn, 1).astype(jnp.float32),
         jnp.zeros((chn, 2), jnp.float32)], axis=1).astype(jnp.bfloat16)   # (32, 8)
    w2b = w2.astype(jnp.bfloat16)                                          # (32, 32)
    w3b = w3.astype(jnp.bfloat16)                                          # (1, 32)
    b2f = b2.reshape(chn, 1).astype(jnp.float32)                           # (32, 1)
    b3f = b3.reshape(1, 1).astype(jnp.float32)                             # (1, 1)

    kernel = functools.partial(
        _bce_ranking_kernel, total_pixels=P, tile_p=tp,
        tiles_per_core=tiles_per_core, has_pad=has_pad)

    grid_spec = pltpu.PrefetchScalarGridSpec(
        num_scalar_prefetch=0,
        grid=(ncs, tiles_per_core),
        in_specs=[
            pl.BlockSpec((3, tp), lambda c, j: (0, c * tiles_per_core + j)),  # stacked input
            pl.BlockSpec((chn, 8), lambda c, j: (0, 0)),       # w1 (b1 folded), resident
            pl.BlockSpec((chn, chn), lambda c, j: (0, 0)),     # w2
            pl.BlockSpec((chn, 1), lambda c, j: (0, 0)),       # b2
            pl.BlockSpec((1, chn), lambda c, j: (0, 0)),       # w3
            pl.BlockSpec((1, 1), lambda c, j: (0, 0)),         # b3
        ],
        out_specs=pl.BlockSpec((8, 128), lambda c, j: (c, 0)),  # per-core partial sum block
        scratch_shapes=[
            pltpu.VMEM((1, 1), jnp.float32),    # running per-core BCE sum
        ],
    )

    out = pl.pallas_call(
        kernel,
        out_shape=jax.ShapeDtypeStruct((ncs * 8, 128), jnp.float32),
        grid_spec=grid_spec,
        compiler_params=pltpu.CompilerParams(
            dimension_semantics=("parallel", "arbitrary"),
            vmem_limit_bytes=vmem_bytes,
        ),
    )(x, w1p, w2b, b2f, w3b, b3f)

    partials = out.reshape(ncs, 8, 128)[:, 0, 0]      # one partial sum per core split
    return jnp.sum(partials) / P


def init_params(key, chn_mid=CHN_MID):
    """Deterministic init mimicking PyTorch Conv2d defaults (uniform +/- 1/sqrt(fan_in))."""
    ks = jax.random.split(key, 6)

    def conv_init(kw, kb, out_c, in_c):
        bound = 1.0 / math.sqrt(in_c)
        w = jax.random.uniform(kw, (out_c, in_c), jnp.float32, -bound, bound)
        b = jax.random.uniform(kb, (out_c, 1), jnp.float32, -bound, bound)
        return w, b

    w1, b1 = conv_init(ks[0], ks[1], chn_mid, 5)
    w2, b2 = conv_init(ks[2], ks[3], chn_mid, chn_mid)
    w3, b3 = conv_init(ks[4], ks[5], 1, chn_mid)
    return (w1, b1, w2, b2, w3, b3)


def _reference_loss(d0, d1, judge, params):
    """Pure-JAX f32 reference matching the PyTorch module exactly (incl. log clamp)."""
    w1, b1, w2, b2, w3, b3 = params
    P = d0.size
    d0 = d0.reshape(1, P).astype(jnp.float32)
    d1 = d1.reshape(1, P).astype(jnp.float32)
    judge = judge.reshape(1, P).astype(jnp.float32)
    feats = jnp.concatenate(
        [d0, d1, d0 - d1, d0 / (d1 + EPS), d1 / (d0 + EPS)], axis=0)  # (5, P)
    h = w1 @ feats + b1
    h = jnp.where(h > 0, h, 0.2 * h)
    h = w2 @ h + b2
    h = jnp.where(h > 0, h, 0.2 * h)
    logit = w3 @ h + b3
    p = jax.nn.sigmoid(logit)
    per = (judge + 1.0) / 2.0
    bce = -(per * jnp.maximum(jnp.log(p), -100.0)
            + (1.0 - per) * jnp.maximum(jnp.log(1.0 - p), -100.0))
    return jnp.mean(bce)


if __name__ == "__main__":
    key = jax.random.PRNGKey(0)
    k_p, k_d0, k_d1, k_j = jax.random.split(key, 4)

    # Small shapes; 2*1*15*15 = 450 pixels so the last tile exercises masking.
    N, C, H, W = 2, 1, 15, 15
    params = init_params(k_p)

    d0 = jax.random.uniform(k_d0, (N, C, H, W), jnp.float32, 0.0, 1.0)
    d1 = jax.random.uniform(k_d1, (N, C, H, W), jnp.float32, 0.0, 1.0)
    judge = jax.random.uniform(k_j, (N, C, H, W), jnp.float32, -1.0, 1.0)

    ref = _reference_loss(d0, d1, judge, params)

    # max_tile=128 -> 4 tiles split 2 per core: exercises accumulation, per-core
    # partial sums and partial-tile masking.
    loss_small = bce_ranking_loss(d0, d1, judge, params, max_tile=128)
    jax.block_until_ready(loss_small)

    # Default (auto tile) path: single tile, one core split.
    loss_big = bce_ranking_loss(d0, d1, judge, params)
    jax.block_until_ready(loss_big)

    for loss in (loss_small, loss_big):
        assert loss.shape == () and bool(jnp.isfinite(loss))
        # bf16 matmuls / approx reciprocal / logits-form BCE introduce small drift.
        assert abs(float(loss) - float(ref)) < 0.05 + 0.1 * abs(float(ref)), (
            float(loss), float(ref))
    print("KERNEL_OK")
</pallas_src>

<mosaic_0001>
module attributes {stable_mosaic.version = 11 : i64} {
  func.func @_bce_ranking_kernel(%arg0: i32, %arg1: i32, %arg2: memref<3x128xf32, #tpu.memory_space<vmem>>, %arg3: memref<32x8xbf16, #tpu.memory_space<vmem>>, %arg4: memref<32x32xbf16, #tpu.memory_space<vmem>>, %arg5: memref<32x1xf32, #tpu.memory_space<vmem>>, %arg6: memref<1x32xbf16, #tpu.memory_space<vmem>>, %arg7: memref<1x1xf32, #tpu.memory_space<vmem>>, %arg8: memref<8x128xf32, #tpu.memory_space<vmem>>, %arg9: memref<1x1xf32, #tpu.memory_space<vmem>>) attributes {dimension_semantics = [#tpu.dimension_semantics<parallel>, #tpu.dimension_semantics<arbitrary>], iteration_bounds = array<i64: 2, 2>, scalar_prefetch = 0 : i64, scratch_operands = 1 : i64, tpu.core_type = #tpu.core_type<tc>, window_params = [{transform_indices = @transform_0, window_bounds = array<i64: 3, 128>}, {pipeline_mode = #tpu.pipeline_mode<synchronous>, transform_indices = @transform_1, window_bounds = array<i64: 32, 8>}, {pipeline_mode = #tpu.pipeline_mode<synchronous>, transform_indices = @transform_2, window_bounds = array<i64: 32, 32>}, {pipeline_mode = #tpu.pipeline_mode<synchronous>, transform_indices = @transform_3, window_bounds = array<i64: 32, 1>}, {pipeline_mode = #tpu.pipeline_mode<synchronous>, transform_indices = @transform_4, window_bounds = array<i64: 1, 32>}, {pipeline_mode = #tpu.pipeline_mode<synchronous>, transform_indices = @transform_5, window_bounds = array<i64: 1, 1>}, {transform_indices = @transform_6, window_bounds = array<i64: 8, 128>}]} {
    %c0_i32 = arith.constant 0 : i32
    %0 = arith.cmpi eq, %arg1, %c0_i32 : i32
    %1 = arith.extui %0 : i1 to i32
    %c0_i32_0 = arith.constant 0 : i32
    %2 = arith.cmpi ne, %1, %c0_i32_0 : i32
    scf.if %2 {
      %cst_32 = arith.constant 0.000000e+00 : f32
      %74 = vector.broadcast %cst_32 : f32 to vector<1x1xf32>
      %c0_33 = arith.constant 0 : index
      %c0_34 = arith.constant 0 : index
      %75 = vector.load %arg9[%c0_33, %c0_34] : memref<1x1xf32, #tpu.memory_space<vmem>>, vector<1x1xf32>
      tpu.vector_store %arg9[%c0_33, %c0_34], %74 {strides = array<i32>} : memref<1x1xf32, #tpu.memory_space<vmem>>, vector<1x1xf32>,
    } else {
    }
    %c0 = arith.constant 0 : index
    %c0_1 = arith.constant 0 : index
    %3 = vector.load %arg2[%c0, %c0_1] : memref<3x128xf32, #tpu.memory_space<vmem>>, vector<3x128xf32>
    %4 = vector.extract_strided_slice %3 {offsets = [0, 0], sizes = [2, 128], strides = [1, 1]} : vector<3x128xf32> to vector<2x128xf32>
    %5 = vector.extract_strided_slice %3 {offsets = [0, 0], sizes = [1, 128], strides = [1, 1]} : vector<3x128xf32> to vector<1x128xf32>
    %6 = vector.extract_strided_slice %3 {offsets = [1, 0], sizes = [1, 128], strides = [1, 1]} : vector<3x128xf32> to vector<1x128xf32>
    %7 = vector.extract_strided_slice %3 {offsets = [2, 0], sizes = [1, 128], strides = [1, 1]} : vector<3x128xf32> to vector<1x128xf32>
    %cst = arith.constant 1.000000e-01 : f32
    %8 = vector.broadcast %cst : f32 to vector<2x128xf32>
    %9 = arith.addf %4, %8 : vector<2x128xf32>
    %10 = tpu.reciprocal %9 {approx = true} : vector<2x128xf32> -> vector<2x128xf32>
    %11 = vector.extract_strided_slice %10 {offsets = [1, 0], sizes = [1, 128], strides = [1, 1]} : vector<2x128xf32> to vector<1x128xf32>
    %12 = arith.mulf %5, %11 : vector<1x128xf32>
    %13 = vector.extract_strided_slice %10 {offsets = [0, 0], sizes = [1, 128], strides = [1, 1]} : vector<2x128xf32> to vector<1x128xf32>
    %14 = arith.mulf %6, %13 : vector<1x128xf32>
    %15 = arith.subf %5, %6 : vector<1x128xf32>
    %cst_2 = arith.constant 1.000000e+00 : f32
    %16 = vector.broadcast %cst_2 : f32 to vector<1x128xf32>
    %cst_3 = arith.constant 0.000000e+00 : f32
    %17 = vector.broadcast %cst_3 : f32 to vector<2x128xf32>
    %18 = tpu.concatenate %4, %15, %12, %14, %16, %17 in 0 : vector<2x128xf32>, vector<1x128xf32>, vector<1x128xf32>, vector<1x128xf32>, vector<1x128xf32>, vector<2x128xf32> -> vector<8x128xf32>
    %19 = arith.truncf %18 : vector<8x128xf32> to vector<8x128xbf16>
    %c0_4 = arith.constant 0 : index
    %c0_5 = arith.constant 0 : index
    %20 = vector.load %arg3[%c0_4, %c0_5] : memref<32x8xbf16, #tpu.memory_space<vmem>>, vector<32x8xbf16>
    %cst_6 = arith.constant dense<0.000000e+00> : vector<32x128xf32>
    %21 = tpu.matmul %20, %19, %cst_6 {dimension_numbers = #tpu.dot_dimension_numbers<[1], [0], [0], [1], [0, 0, 1, 1], [], []>} : vector<32x8xbf16>, vector<8x128xbf16>, vector<32x128xf32> -> vector<32x128xf32>
    %cst_7 = arith.constant 2.000000e-01 : f32
    %22 = vector.broadcast %cst_7 : f32 to vector<32x128xf32>
    %23 = arith.mulf %22, %21 : vector<32x128xf32>
    %24 = arith.maximumf %21, %23 : vector<32x128xf32>
    %25 = arith.truncf %24 : vector<32x128xf32> to vector<32x128xbf16>
    %c0_8 = arith.constant 0 : index
    %c0_9 = arith.constant 0 : index
    %26 = vector.load %arg4[%c0_8, %c0_9] : memref<32x32xbf16, #tpu.memory_space<vmem>>, vector<32x32xbf16>
    %cst_10 = arith.constant dense<0.000000e+00> : vector<32x128xf32>
    %27 = tpu.matmul %26, %25, %cst_10 {dimension_numbers = #tpu.dot_dimension_numbers<[1], [0], [0], [1], [0, 0, 1, 1], [], []>} : vector<32x32xbf16>, vector<32x128xbf16>, vector<32x128xf32> -> vector<32x128xf32>
    %c0_11 = arith.constant 0 : index
    %c0_12 = arith.constant 0 : index
    %28 = vector.load %arg5[%c0_11, %c0_12] : memref<32x1xf32, #tpu.memory_space<vmem>>, vector<32x1xf32>
    %29 = vector.broadcast %28 : vector<32x1xf32> to vector<32x128xf32>
    %30 = arith.addf %27, %29 : vector<32x128xf32>
    %cst_13 = arith.constant 2.000000e-01 : f32
    %31 = vector.broadcast %cst_13 : f32 to vector<32x128xf32>
    %32 = arith.mulf %31, %30 : vector<32x128xf32>
    %33 = arith.maximumf %30, %32 : vector<32x128xf32>
    %34 = arith.truncf %33 : vector<32x128xf32> to vector<32x128xbf16>
    %c0_14 = arith.constant 0 : index
    %c0_15 = arith.constant 0 : index
    %35 = vector.load %arg6[%c0_14, %c0_15] : memref<1x32xbf16, #tpu.memory_space<vmem>>, vector<1x32xbf16>
    %cst_16 = arith.constant dense<0.000000e+00> : vector<1x128xf32>
    %36 = tpu.matmul %35, %34, %cst_16 {dimension_numbers = #tpu.dot_dimension_numbers<[1], [0], [0], [1], [0, 0, 1, 1], [], []>} : vector<1x32xbf16>, vector<32x128xbf16>, vector<1x128xf32> -> vector<1x128xf32>
    %c0_17 = arith.constant 0 : index
    %c0_18 = arith.constant 0 : index
    %37 = vector.load %arg7[%c0_17, %c0_18] : memref<1x1xf32, #tpu.memory_space<vmem>>, vector<1x1xf32>
    %38 = vector.broadcast %37 : vector<1x1xf32> to vector<1x128xf32>
    %39 = arith.addf %36, %38 : vector<1x128xf32>
    %cst_19 = arith.constant 1.000000e+00 : f32
    %40 = vector.broadcast %cst_19 : f32 to vector<1x128xf32>
    %41 = arith.addf %7, %40 : vector<1x128xf32>
    %cst_20 = arith.constant 5.000000e-01 : f32
    %42 = vector.broadcast %cst_20 : f32 to vector<1x128xf32>
    %43 = arith.mulf %41, %42 : vector<1x128xf32>
    %cst_21 = arith.constant 0.000000e+00 : f32
    %44 = vector.broadcast %cst_21 : f32 to vector<1x128xf32>
    %45 = arith.maximumf %39, %44 : vector<1x128xf32>
    %46 = math.absf %39 : vector<1x128xf32>
    %cst_22 = arith.constant 0.000000e+00 : f32
    %47 = vector.broadcast %cst_22 : f32 to vector<1x128xf32>
    %48 = arith.subf %47, %46 : vector<1x128xf32>
    %49 = math.exp %48 : vector<1x128xf32>
    %cst_23 = arith.constant 1.000000e+00 : f32
    %50 = vector.broadcast %cst_23 : f32 to vector<1x128xf32>
    %51 = arith.addf %50, %49 : vector<1x128xf32>
    %52 = math.log %51 : vector<1x128xf32>
    %53 = arith.addf %45, %52 : vector<1x128xf32>
    %54 = arith.mulf %43, %39 : vector<1x128xf32>
    %55 = arith.subf %53, %54 : vector<1x128xf32>
    %c0_24 = arith.constant 0 : index
    %c0_25 = arith.constant 0 : index
    %56 = vector.load %arg9[%c0_24, %c0_25] : memref<1x1xf32, #tpu.memory_space<vmem>>, vector<1x1xf32>
    %57 = vector.shape_cast %55 : vector<1x128xf32> to vector<1x1x128xf32>
    %cst_26 = arith.constant dense<0.000000e+00> : vector<1xf32>
    %58 = vector.multi_reduction <add>, %57, %cst_26 [1, 2] : vector<1x1x128xf32> to vector<1xf32>
    %59 = vector.shape_cast %58 : vector<1xf32> to vector<1x1x1xf32>
    %60 = vector.extract %59[0, 0, 0] : f32 from vector<1x1x1xf32>
    %61 = vector.broadcast %60 : f32 to vector<1x1xf32>
    %62 = arith.addf %56, %61 : vector<1x1xf32>
    %c0_27 = arith.constant 0 : index
    %c0_28 = arith.constant 0 : index
    %63 = vector.load %arg9[%c0_27, %c0_28] : memref<1x1xf32, #tpu.memory_space<vmem>>, vector<1x1xf32>
    tpu.vector_store %arg9[%c0_27, %c0_28], %62 {strides = array<i32>} : memref<1x1xf32, #tpu.memory_space<vmem>>, vector<1x1xf32>,
    %c2_i32 = arith.constant 2 : i32
    %64 = arith.muli %arg0, %c2_i32 : i32
    %65 = arith.addi %64, %arg1 : i32
    %c1_i32 = arith.constant 1 : i32
    %66 = arith.addi %65, %c1_i32 : i32
    %c128_i32 = arith.constant 128 : i32
    %67 = arith.muli %66, %c128_i32 : i32
    %c450_i32 = arith.constant 450 : i32
    %68 = arith.cmpi sgt, %67, %c450_i32 : i32
    %69 = arith.extui %68 : i1 to i32
    %c0_i32_29 = arith.constant 0 : i32
    %70 = arith.cmpi ne, %69, %c0_i32_29 : i32
    scf.if %70 {
      %74 = tpu.iota {dimensions = array<i32: 1>} : vector<1x128xi32>
      %c128_i32_32 = arith.constant 128 : i32
      %75 = arith.muli %65, %c128_i32_32 : i32
      %76 = vector.broadcast %75 : i32 to vector<1x128xi32>
      %77 = arith.addi %76, %74 : vector<1x128xi32>
      %c450_i32_33 = arith.constant 450 : i32
      %78 = vector.broadcast %c450_i32_33 : i32 to vector<1x128xi32>
      %79 = arith.cmpi sge, %77, %78 : vector<1x128xi32>
      %c0_34 = arith.constant 0 : index
      %c0_35 = arith.constant 0 : index
      %80 = vector.load %arg9[%c0_34, %c0_35] : memref<1x1xf32, #tpu.memory_space<vmem>>, vector<1x1xf32>
      %cst_36 = arith.constant 0.000000e+00 : f32
      %81 = vector.broadcast %cst_36 : f32 to vector<1x128xf32>
      %82 = arith.select %79, %55, %81 : vector<1x128xi1>, vector<1x128xf32>
      %83 = vector.shape_cast %82 : vector<1x128xf32> to vector<1x1x128xf32>
      %cst_37 = arith.constant dense<0.000000e+00> : vector<1xf32>
      %84 = vector.multi_reduction <add>, %83, %cst_37 [1, 2] : vector<1x1x128xf32> to vector<1xf32>
      %85 = vector.shape_cast %84 : vector<1xf32> to vector<1x1x1xf32>
      %86 = vector.extract %85[0, 0, 0] : f32 from vector<1x1x1xf32>
      %87 = vector.broadcast %86 : f32 to vector<1x1xf32>
      %88 = arith.subf %80, %87 : vector<1x1xf32>
      %c0_38 = arith.constant 0 : index
      %c0_39 = arith.constant 0 : index
      %89 = vector.load %arg9[%c0_38, %c0_39] : memref<1x1xf32, #tpu.memory_space<vmem>>, vector<1x1xf32>
      tpu.vector_store %arg9[%c0_38, %c0_39], %88 {strides = array<i32>} : memref<1x1xf32, #tpu.memory_space<vmem>>, vector<1x1xf32>,
    } else {
    }
    %c1_i32_30 = arith.constant 1 : i32
    %71 = arith.cmpi eq, %arg1, %c1_i32_30 : i32
    %72 = arith.extui %71 : i1 to i32
    %c0_i32_31 = arith.constant 0 : i32
    %73 = arith.cmpi ne, %72, %c0_i32_31 : i32
    scf.if %73 {
      %c0_32 = arith.constant 0 : index
      %c0_33 = arith.constant 0 : index
      %74 = vector.load %arg9[%c0_32, %c0_33] : memref<1x1xf32, #tpu.memory_space<vmem>>, vector<1x1xf32>
      %75 = vector.shape_cast %74 : vector<1x1xf32> to vector<1x1xf32>
      %76 = vector.broadcast %75 : vector<1x1xf32> to vector<8x128xf32>
      %c0_34 = arith.constant 0 : index
      %c0_35 = arith.constant 0 : index
      %77 = vector.load %arg8[%c0_34, %c0_35] : memref<8x128xf32, #tpu.memory_space<vmem>>, vector<8x128xf32>
      tpu.vector_store %arg8[%c0_34, %c0_35], %76 {strides = array<i32>} : memref<8x128xf32, #tpu.memory_space<vmem>>, vector<8x128xf32>,
    } else {
    }
    return
  }
  func.func @transform_0(%arg0: i32, %arg1: i32) -> (i32, i32) {
    %c2_i32 = arith.constant 2 : i32
    %0 = arith.muli %arg0, %c2_i32 : i32
    %1 = arith.addi %0, %arg1 : i32
    %c0_i32 = arith.constant 0 : i32
    %c0_i32_0 = arith.constant 0 : i32
    return %c0_i32, %1 : i32, i32
  }
  func.func @transform_1(%arg0: i32, %arg1: i32) -> (i32, i32) {
    %c0_i32 = arith.constant 0 : i32
    %c0_i32_0 = arith.constant 0 : i32
    %c0_i32_1 = arith.constant 0 : i32
    return %c0_i32, %c0_i32_0 : i32, i32
  }
  func.func @transform_2(%arg0: i32, %arg1: i32) -> (i32, i32) {
    %c0_i32 = arith.constant 0 : i32
    %c0_i32_0 = arith.constant 0 : i32
    %c0_i32_1 = arith.constant 0 : i32
    return %c0_i32, %c0_i32_0 : i32, i32
  }
  func.func @transform_3(%arg0: i32, %arg1: i32) -> (i32, i32) {
    %c0_i32 = arith.constant 0 : i32
    %c0_i32_0 = arith.constant 0 : i32
    %c0_i32_1 = arith.constant 0 : i32
    return %c0_i32, %c0_i32_0 : i32, i32
  }
  func.func @transform_4(%arg0: i32, %arg1: i32) -> (i32, i32) {
    %c0_i32 = arith.constant 0 : i32
    %c0_i32_0 = arith.constant 0 : i32
    %c0_i32_1 = arith.constant 0 : i32
    return %c0_i32, %c0_i32_0 : i32, i32
  }
  func.func @transform_5(%arg0: i32, %arg1: i32) -> (i32, i32) {
    %c0_i32 = arith.constant 0 : i32
    %c0_i32_0 = arith.constant 0 : i32
    %c0_i32_1 = arith.constant 0 : i32
    return %c0_i32, %c0_i32_0 : i32, i32
  }
  func.func @transform_6(%arg0: i32, %arg1: i32) -> (i32, i32) {
    %c0_i32 = arith.constant 0 : i32
    %c0_i32_0 = arith.constant 0 : i32
    return %arg0, %c0_i32 : i32, i32
  }
}

</mosaic_0001>

<llo_original>
// kernel: tpu_custom_call.1
$region0: #{tpu_custom_call.1}
  #allocation0 [shape = 'u32[]', space=smem, size = 0x4, offset = 0x4, fixed_abs, tag = 'smem constant byte address 0x4 - core index']
  #allocation1 [shape = 'u32[144,128]{1,0:T(1,128)}', space=vmem, size = 0x12000, scoped, tag = 'internal scratch']
  #allocation2 [shape = 'f32[1,1]{1,0:T(1,128)}', space=vmem, size = 0x200, scoped, tag = 'scratch operand']
  #allocation3 [shape = 'f32[1,1]{1,0:T(1,128)S(1)}', space=vmem, size = 0x200, scoped, tag = 'scoped memory for tpu_custom_call.1']
  %s0 = inlined_call_operand.vmem [shape: f32[3,512], index: 0, kind: input, shape index: {}]
  %s1 = inlined_call_operand.vmem [shape: bf16[32,8], index: 1, kind: input, shape index: {}]
  %s2 = inlined_call_operand.vmem [shape: bf16[32,32], index: 2, kind: input, shape index: {}]
  %s3 = inlined_call_operand.vmem [shape: f32[32,1], index: 3, kind: input, shape index: {}]
  %s4 = inlined_call_operand.vmem [shape: bf16[1,32], index: 4, kind: input, shape index: {}]
  %s5 = inlined_call_operand.<no memory space> [shape: f32[1,1], index: 5, kind: input, shape index: {}]
  %s6 = inlined_call_operand.hbm [shape: f32[16,128], index: 6, kind: output, shape index: {}]
  %s7 = sld [smem:[#allocation0]]
  $region69: #{tpu_custom_call.1} parent=0
    _
  %s9 = ssub.s32 1, %s7
  %s10 = scalar_select 0, %s9, %s7
  %v11 = vstv %s5
  %12 = vst [vmem:[#allocation3] sm:$0x1] %v11
  $region1: #{tpu_custom_call.1} parent=0
    #allocation4 [shape = 'u8[8192]{0}', space=vmem, size = 0x2000, scoped, tag = 'output window, operand 0']
    #allocation5 [shape = 's32[2]{0}', space=sflag, size = 0x8, scoped, tag = 'scoped memory for tpu_custom_call.1']
    %13 = vsyncpa [#allocation5], 0
    %s14 = scalar_lea.sflag [#allocation5], 1
    %15 = vsyncpa %s14, 0
    loop: start=0, step=1, limit=6
    $region2: #{tpu_custom_call.1} parent=1 // loop_pre_header
      _
    $region3: #{tpu_custom_call.1} parent=1 // loop_header
      %s17 = sphi 0, %s21
      %p18 = scmp.ge.s32.totalorder %s17, 6
      %s24 = sphi 0, %s36
      %s25 = sphi 0, %s32
      %s26 = sphi 0, %s24
      %s27 = sphi 0, %s25
      %s28 = sphi 0, %s26
      %s29 = sphi 0, %s27
      %s43 = sphi 0, %s45
      %s46 = sphi 0, %s43
      %s47 = sphi 0, %s46
      %s63 = sphi 0, %s47
      %s67 = sphi 0, %s67
      %s69 = sphi 0, %s67
      %s70 = sphi 0, %s69
      %s84 = sphi 0, %s70
      %s88 = sphi 0, %s88
      %s90 = sphi 0, %s88
      %s91 = sphi 0, %s90
      %s105 = sphi 0, %s91
      %s109 = sphi 0, %s109
      %s111 = sphi 0, %s109
      %s112 = sphi 0, %s111
      %s126 = sphi 0, %s112
      %s130 = sphi 0, %s130
      %s132 = sphi 0, %s130
      %s133 = sphi 0, %s132
      %s147 = sphi 0, %s133
      %s151 = sphi 0, %s151
      %s153 = sphi 0, %s151
      %s154 = sphi 0, %s153
      %s168 = sphi 0, %s154
      %s174 = sphi 0, %s176
      %s177 = sphi 0, %s174
      %s178 = sphi 0, %s177
      %s194 = sphi 0, %s178
    $region4: #{tpu_custom_call.1} parent=1 // loop_header_branch
      %20 = sbr.rel (%p18) target = $region8
    $region5: #{tpu_custom_call.1} parent=1 // loop_body
      %s22 = ssub.s32 %s17, 1
      %s23 = ssub.s32 %s17, 2
      %s30 = sadd.s32 1, %s25
      %p31 = scmp.ge.s32.totalorder %s30, 2
      %s32 = scalar_select %p31, 0, %s30
      %s33 = sadd.s32 1, %s24
      %s34 = scalar_select %p31, %s33, %s24
      %p35 = scmp.ge.s32.totalorder %s34, 2
      %s36 = scalar_select %p35, 0, %s34
      %s37 = smul.u32 %s24, 2
      %s38 = sadd.s32 %s37, %s25
      %s39 = smul.u32 %s36, 2
      %s40 = sadd.s32 %s39, %s32
      %s41 = ssub.s32 %s38, %s40
      %p42 = scmp.eq.s32.totalorder %s41, 0
      %s44 = sadd.s32 %s43, 1
      %s45 = scalar_select %p42, %s43, %s44
      %p48 = pneg %p42
      %p49 = scmp.eq.s32.totalorder %s17, 3
      %p50 = por %p48, %p49
      %p51 = scmp.ne.s32.totalorder %s43, %s46
      %p52 = scmp.eq.s32.totalorder %s17, 0
      %p53 = por %p51, %p52
      %p54 = scmp.ne.s32.totalorder %s43, %s46
      %p55 = scmp.eq.s32.totalorder %s22, 3
      %p56 = por %p54, %p55
      %p57 = scmp.ne.s32.totalorder %s46, %s47
      %p58 = scmp.eq.s32.totalorder %s22, 0
      %p59 = por %p57, %p58
      %p60 = scmp.ne.s32.totalorder %s46, %s47
      %p61 = scmp.eq.s32.totalorder %s23, 3
      %p62 = por %p60, %p61
      %p64 = scmp.ne.s32.totalorder %s47, %s63
      %p65 = scmp.eq.s32.totalorder %s23, 0
      %p66 = por %p64, %p65
      %s68 = sadd.s32 %s67, 1
      %p71 = scmp.eq.s32.totalorder %s17, 3
      %p72 = scmp.ne.s32.totalorder %s67, %s69
      %p73 = scmp.eq.s32.totalorder %s17, 0
      %p74 = por %p72, %p73
      %p75 = scmp.ne.s32.totalorder %s67, %s69
      %p76 = scmp.eq.s32.totalorder %s22, 3
      %p77 = por %p75, %p76
      %p78 = scmp.ne.s32.totalorder %s69, %s70
      %p79 = scmp.eq.s32.totalorder %s22, 0
      %p80 = por %p78, %p79
      %p81 = scmp.ne.s32.totalorder %s69, %s70
      %p82 = scmp.eq.s32.totalorder %s23, 3
      %p83 = por %p81, %p82
      %p85 = scmp.ne.s32.totalorder %s70, %s84
      %p86 = scmp.eq.s32.totalorder %s23, 0
      %p87 = por %p85, %p86
      %s89 = sadd.s32 %s88, 1
      %p92 = scmp.eq.s32.totalorder %s17, 3
      %p93 = scmp.ne.s32.totalorder %s88, %s90
      %p94 = scmp.eq.s32.totalorder %s17, 0
      %p95 = por %p93, %p94
      %p96 = scmp.ne.s32.totalorder %s88, %s90
      %p97 = scmp.eq.s32.totalorder %s22, 3
      %p98 = por %p96, %p97
      %p99 = scmp.ne.s32.totalorder %s90, %s91
      %p100 = scmp.eq.s32.totalorder %s22, 0
      %p101 = por %p99, %p100
      %p102 = scmp.ne.s32.totalorder %s90, %s91
      %p103 = scmp.eq.s32.totalorder %s23, 3
      %p104 = por %p102, %p103
      %p106 = scmp.ne.s32.totalorder %s91, %s105
      %p107 = scmp.eq.s32.totalorder %s23, 0
      %p108 = por %p106, %p107
      %s110 = sadd.s32 %s109, 1
      %p113 = scmp.eq.s32.totalorder %s17, 3
      %p114 = scmp.ne.s32.totalorder %s109, %s111
      %p115 = scmp.eq.s32.totalorder %s17, 0
      %p116 = por %p114, %p115
      %p117 = scmp.ne.s32.totalorder %s109, %s111
      %p118 = scmp.eq.s32.totalorder %s22, 3
      %p119 = por %p117, %p118
      %p120 = scmp.ne.s32.totalorder %s111, %s112
      %p121 = scmp.eq.s32.totalorder %s22, 0
      %p122 = por %p120, %p121
      %p123 = scmp.ne.s32.totalorder %s111, %s112
      %p124 = scmp.eq.s32.totalorder %s23, 3
      %p125 = por %p123, %p124
      %p127 = scmp.ne.s32.totalorder %s112, %s126
      %p128 = scmp.eq.s32.totalorder %s23, 0
      %p129 = por %p127, %p128
      %s131 = sadd.s32 %s130, 1
      %p134 = scmp.eq.s32.totalorder %s17, 3
      %p135 = scmp.ne.s32.totalorder %s130, %s132
      %p136 = scmp.eq.s32.totalorder %s17, 0
      %p137 = por %p135, %p136
      %p138 = scmp.ne.s32.totalorder %s130, %s132
      %p139 = scmp.eq.s32.totalorder %s22, 3
      %p140 = por %p138, %p139
      %p141 = scmp.ne.s32.totalorder %s132, %s133
      %p142 = scmp.eq.s32.totalorder %s22, 0
      %p143 = por %p141, %p142
      %p144 = scmp.ne.s32.totalorder %s132, %s133
      %p145 = scmp.eq.s32.totalorder %s23, 3
      %p146 = por %p144, %p145
      %p148 = scmp.ne.s32.totalorder %s133, %s147
      %p149 = scmp.eq.s32.totalorder %s23, 0
      %p150 = por %p148, %p149
      %s152 = sadd.s32 %s151, 1
      %p155 = scmp.eq.s32.totalorder %s17, 3
      %p156 = scmp.ne.s32.totalorder %s151, %s153
      %p157 = scmp.eq.s32.totalorder %s17, 0
      %p158 = por %p156, %p157
      %p159 = scmp.ne.s32.totalorder %s151, %s153
      %p160 = scmp.eq.s32.totalorder %s22, 3
      %p161 = por %p159, %p160
      %p162 = scmp.ne.s32.totalorder %s153, %s154
      %p163 = scmp.eq.s32.totalorder %s22, 0
      %p164 = por %p162, %p163
      %p165 = scmp.ne.s32.totalorder %s153, %s154
      %p166 = scmp.eq.s32.totalorder %s23, 3
      %p167 = por %p165, %p166
      %p169 = scmp.ne.s32.totalorder %s154, %s168
      %p170 = scmp.eq.s32.totalorder %s23, 0
      %p171 = por %p169, %p170
      %s172 = ssub.s32 %s24, %s36
      %p173 = scmp.eq.s32.totalorder %s172, 0
      %s175 = sadd.s32 %s174, 1
      %s176 = scalar_select %p173, %s174, %s175
      %p179 = pneg %p173
      %p180 = scmp.eq.s32.totalorder %s17, 3
      %p181 = por %p179, %p180
      %p182 = scmp.ne.s32.totalorder %s174, %s177
      %p183 = scmp.eq.s32.totalorder %s17, 0
      %p184 = por %p182, %p183
      %p185 = scmp.ne.s32.totalorder %s174, %s177
      %p186 = scmp.eq.s32.totalorder %s22, 3
      %p187 = por %p185, %p186
      %p188 = scmp.ne.s32.totalorder %s177, %s178
      %p189 = scmp.eq.s32.totalorder %s22, 0
      %p190 = por %p188, %p189
      %p191 = scmp.ne.s32.totalorder %s177, %s178
      %p192 = scmp.eq.s32.totalorder %s23, 3
      %p193 = por %p191, %p192
      %p195 = scmp.ne.s32.totalorder %s178, %s194
      %p196 = scmp.eq.s32.totalorder %s23, 0
      %p197 = por %p195, %p196
      %p198 = scmp.le.s32.totalorder 1, %s17
      %p199 = scmp.lt.s32.totalorder %s17, 5
      %p200 = pnand %p198, %p199
      %p201 = pneg %p200
      // Predicated region
      $region9: #{tpu_custom_call.1} parent=5 // pred_check
        _
      $region10: #{tpu_custom_call.1} parent=5 // pred_check_branch
        %203 = sbr.rel (%p200) target = $region12
      $region11: #{tpu_custom_call.1} parent=5 // pred_region
        %s204 = ssub.s32 %s17, 1
        // Predicated region
        $region13: #{tpu_custom_call.1} parent=11 // pred_check
          %p205 = pneg %p80
        $region14: #{tpu_custom_call.1} parent=11 // pred_check_branch
          %207 = sbr.rel (%p205) target = $region16
        $region15: #{tpu_custom_call.1} parent=11 // pred_region
          _
        $region16: #{tpu_custom_call.1} parent=11 // pred_fallthru
          _
        // Predicated region
        $region17: #{tpu_custom_call.1} parent=11 // pred_check
          %p208 = pneg %p101
        $region18: #{tpu_custom_call.1} parent=11 // pred_check_branch
          %210 = sbr.rel (%p208) target = $region20
        $region19: #{tpu_custom_call.1} parent=11 // pred_region
          _
        $region20: #{tpu_custom_call.1} parent=11 // pred_fallthru
          _
        // Predicated region
        $region21: #{tpu_custom_call.1} parent=11 // pred_check
          %p211 = pneg %p122
        $region22: #{tpu_custom_call.1} parent=11 // pred_check_branch
          %213 = sbr.rel (%p211) target = $region24
        $region23: #{tpu_custom_call.1} parent=11 // pred_region
          _
        $region24: #{tpu_custom_call.1} parent=11 // pred_fallthru
          _
        // Predicated region
        $region25: #{tpu_custom_call.1} parent=11 // pred_check
          %p214 = pneg %p143
        $region26: #{tpu_custom_call.1} parent=11 // pred_check_branch
          %216 = sbr.rel (%p214) target = $region28
        $region27: #{tpu_custom_call.1} parent=11 // pred_region
          _
        $region28: #{tpu_custom_call.1} parent=11 // pred_fallthru
          _
        // Predicated region
        $region29: #{tpu_custom_call.1} parent=11 // pred_check
          %p217 = pneg %p164
        $region30: #{tpu_custom_call.1} parent=11 // pred_check_branch
          %219 = sbr.rel (%p217) target = $region32
        $region31: #{tpu_custom_call.1} parent=11 // pred_region
          _
        $region32: #{tpu_custom_call.1} parent=11 // pred_fallthru
          _
      $region12: #{tpu_custom_call.1} parent=5 // pred_fallthru
        _
      %p220 = scmp.lt.s32.totalorder %s17, 4
      // Predicated region
      $region33: #{tpu_custom_call.1} parent=5 // pred_check
        %p221 = pneg %p220
      $region34: #{tpu_custom_call.1} parent=5 // pred_check_branch
        %223 = sbr.rel (%p221) target = $region36
      $region35: #{tpu_custom_call.1} parent=5 // pred_region
        // Predicated region
        $region37: #{tpu_custom_call.1} parent=35 // pred_check
          %p224 = pneg %p53
        $region38: #{tpu_custom_call.1} parent=35 // pred_check_branch
          %226 = sbr.rel (%p224) target = $region40
        $region39: #{tpu_custom_call.1} parent=35 // pred_region
          %s227 = smul.u32 %s24, 2
          %s228 = sadd.s32 %s227, %s25
          %p229 = scmp.lt.s32.totalorder %s228, 3
          %s230 = scalar_select %p229, %s228, 3
          %s231 = smul.addr %s230, 4
          %s232 = scalar_lea.vmem %s0, %s231
          %s233 = smul.u32 %s24, 2
          %s234 = sadd.s32 %s233, %s25
        $region40: #{tpu_custom_call.1} parent=35 // pred_fallthru
          _
      $region36: #{tpu_custom_call.1} parent=5 // pred_fallthru
        _
      %p235 = scmp.le.s32.totalorder 1, %s17
      %p236 = scmp.lt.s32.totalorder %s17, 5
      %p237 = pnand %p235, %p236
      %p238 = pneg %p237
      // Predicated region
      $region41: #{tpu_custom_call.1} parent=5 // pred_check
        _
      $region42: #{tpu_custom_call.1} parent=5 // pred_check_branch
        %240 = sbr.rel (%p237) target = $region44
      $region43: #{tpu_custom_call.1} parent=5 // pred_region
        %s241 = ssub.s32 %s17, 1
        %s242 = smul.u32 %s26, 2
        %s243 = sadd.s32 %s242, %s27
        %p244 = scmp.lt.s32.totalorder %s243, 3
        %s245 = scalar_select %p244, %s243, 3
        %s246 = smul.addr %s245, 4
        %s247 = scalar_lea.vmem %s0, %s246
        %p248 = pneg %p59
        %p249 = pneg %p56
        %p250 = pneg %p80
        %p251 = pneg %p77
        %p252 = pneg %p101
        %p253 = pneg %p98
        %p254 = pneg %p122
        %p255 = pneg %p119
        %p256 = pneg %p143
        %p257 = pneg %p140
        %p258 = pneg %p164
        %p259 = pneg %p161
        %p260 = pneg %p190
        %p261 = pneg %p187
        %s262 = sand.u32 %s177, 1
        %s263 = scalar_lea.sflag [#allocation5], %s262
        %s264 = sand.u32 %s177, 1
        %s265 = smul.addr %s264, 8
        %s266 = scalar_lea.vmem [#allocation4], %s265
        %s267 = smul.u32 %s26, 2
        %s268 = sadd.s32 %s267, %s27
        %p269 = scmp.lt.s32.totalorder %s268, 3
        %s270 = scalar_select %p269, %s268, 3
        %s271 = smul.addr %s270, 4
        %s272 = scalar_lea.vmem %s0, %s271
        %s273 = smul.u32 %s26, 2
        %s274 = sadd.s32 %s273, %s27
        %p276 = scmp.eq.s32.totalorder %s27, 0
        // Predicated region
        $region45: #{tpu_custom_call.1} parent=43 // pred_check
          %p277 = pneg %p276
        $region46: #{tpu_custom_call.1} parent=43 // pred_check_branch
          %279 = sbr.rel (%p277) target = $region48
        $region47: #{tpu_custom_call.1} parent=43 // pred_region
          %vm280 = vcmask 0
          %281 = vst.msk [vmem:[#allocation2] sm:$0x1] %vm280, 0.0
        $region48: #{tpu_custom_call.1} parent=43 // pred_fallthru
          _
        %v282 = vld [vmem:[%s272] sm:$0x7]
        %v283 = vadd.f32 %v282, 0.1
        %v284 = vrcp.pop %v283
        %v286 = vrot.slane %v284, 1
        %v288 = vmul.f32 %v282, %v286
        %v289 = vrot.slane %v284, 7
        %v291 = vmul.f32 %v282, %v289
        %v293 = vrot.slane %v282, 1
        %v295 = vsub.f32 %v282, %v293
        %v297 = vrot.slane %v295, 6
        %v300 = vrot.slane %v288, 5
        %v303 = vrot.slane %v291, 5
        %vm305 = vcmask 1041408
        %v306 = vsel %vm305, %v282, %v297
        %vm307 = vcmask 1042432
        %v308 = vsel %vm307, %v306, %v300
        %vm309 = vcmask 1043456
        %v310 = vsel %vm309, %v308, %v303
        %vm311 = vcmask 1044480
        %v312 = vsel %vm311, %v310, 1.0
        %vm313 = vcmask 1045504
        %v314 = vsel %vm313, %v312, 0.0
        %v315 = vpack.c.bf16 %v314, %v314
        %v316 = vld [vmem:[%s1] sm:$0xf]
        %v317 = vld [vmem:[%s1 + $0x4] sm:$0xf]
        %v318 = vld [vmem:[%s1 + $0x8] sm:$0xf]
        %v319 = vld [vmem:[%s1 + $0xc] sm:$0xf]
        %v324 = vunpack.c.l.b16 %v316
        %v325 = vunpack.c.l.b16 %v317
        %v326 = vunpack.c.l.b16 %v318
        %v327 = vunpack.c.l.b16 %v319
        %v328 = vpack.c.b16 %v325, %v324
        %v329 = vpack.c.b16 %v327, %v326
        %vm330 = vcmask 64512
        %v332 = vsel %vm330, %v328, 0
        %v335 = vsel %vm330, %v329, 0
        %v338 = vsel %vm309, %v315, 0
        %340 = vmatprep.subr.bf16.mxu0 0
        %341 = vmatpush1.bf16.msra.mxu0 %v338
        %342 = vmatprep.subr.bf16.mxu0 0
        %343 = vmatpush1.bf16.msra.mxu0 0
        %344 = vmatprep.subr.bf16.mxu0 0
        %345 = vmatpush1.bf16.msra.mxu0 0
        %346 = vmatprep.subr.bf16.mxu0 0
        %347 = vmatpush1.bf16.msra.mxu0 0
        %348 = vmatprep.subr.bf16.mxu0 0
        %349 = vmatpush1.bf16.msra.mxu0 0
        %350 = vmatprep.subr.bf16.mxu0 0
        %351 = vmatpush1.bf16.msra.mxu0 0
        %352 = vmatprep.subr.bf16.mxu0 0
        %353 = vmatpush1.bf16.msra.mxu0 0
        %354 = vmatprep.subr.bf16.mxu0 0
        %355 = vmatpush1.bf16.msra.mxu0 0
        %356 = vmatprep.subr.bf16.mxu0 0
        %357 = vmatpush1.bf16.msra.mxu0 0
        %358 = vmatprep.subr.bf16.mxu0 0
        %359 = vmatpush1.bf16.msra.mxu0 0
        %360 = vmatprep.subr.bf16.mxu0 0
        %361 = vmatpush1.bf16.msra.mxu0 0
        %362 = vmatprep.subr.bf16.mxu0 0
        %363 = vmatpush1.bf16.msra.mxu0 0
        %364 = vmatprep.subr.bf16.mxu0 0
        %365 = vmatpush1.bf16.msra.mxu0 0
        %366 = vmatprep.subr.bf16.mxu0 0
        %367 = vmatpush1.bf16.msra.mxu0 0
        %368 = vmatprep.subr.bf16.mxu0 0
        %369 = vmatpush1.bf16.msra.mxu0 0
        %370 = vmatprep.subr.bf16.mxu0 0
        %371 = vmatpush1.bf16.msra.mxu0 0
        %372 = vmatprep.mubr.bf16.mxu0 0
        %373 = vmatmul.mubr.bf16.gmra.mrb[0].mxu0 %v332
        %v374 = vpop.f32.mrb[0].mxu0
        %v375 = vadd.f32 0.0, %v374
        %v376 = vpop.f32.mrb[0].mxu0
        %v377 = vpop.f32.mrb[0].mxu0
        %v378 = vadd.f32 0.0, %v377
        %v379 = vpop.f32.mrb[0].mxu0
        %380 = vmatprep.mubr.bf16.mxu0 0
        %381 = vmatmul.mubr.bf16.gmra.mrb[0].mxu0 %v335
        %v382 = vpop.f32.mrb[0].mxu0
        %v383 = vadd.f32 0.0, %v382
        %v384 = vpop.f32.mrb[0].mxu0
        %v385 = vpop.f32.mrb[0].mxu0
        %v386 = vadd.f32 0.0, %v385
        %v387 = vpop.f32.mrb[0].mxu0
        %388 = vdwg.mxu0
        %v389 = vmul.f32 %v375, 0.2
        %v390 = vmul.f32 %v378, 0.2
        %v391 = vmul.f32 %v383, 0.2
        %v392 = vmul.f32 %v386, 0.2
        %v393 = vmax.f32 %v375, %v389
        %v394 = vmax.f32 %v378, %v390
        %v395 = vmax.f32 %v383, %v391
        %v396 = vmax.f32 %v386, %v392
        %v397 = vpack.c.bf16 %v394, %v393
        %v398 = vpack.c.bf16 %v396, %v395
        %v399 = vld [vmem:[%s2] sm:$0xf]
        %v400 = vld [vmem:[%s2 + $0x4] sm:$0xf]
        %v401 = vld [vmem:[%s2 + $0x8] sm:$0xf]
        %v402 = vld [vmem:[%s2 + $0xc] sm:$0xf]
        %v403 = vld [vmem:[%s3] sm:$0xff]
        %v404 = vld [vmem:[%s3 + $0x8] sm:$0xff]
        %v405 = vld [vmem:[%s3 + $0x10] sm:$0xff]
        %v406 = vld [vmem:[%s3 + $0x18] sm:$0xff]
        %408 = vset.pattern.permute.xlu0 0
        %409 = vperm.xlu0 %408, %v403
        %v410 = vpop.permute.xlu0 %409
        %413 = vset.pattern.permute.xlu0 0
        %414 = vperm.xlu0 %413, %v404
        %v415 = vpop.permute.xlu0 %414
        %418 = vset.pattern.permute.xlu0 0
        %419 = vperm.xlu0 %418, %v405
        %v420 = vpop.permute.xlu0 %419
        %423 = vset.pattern.permute.xlu0 0
        %424 = vperm.xlu0 %423, %v406
        %v425 = vpop.permute.xlu0 %424
        %v431 = vunpack.c.l.b16 %v399
        %v432 = vunpack.c.l.b16 %v400
        %v433 = vunpack.c.l.b16 %v401
        %v434 = vunpack.c.l.b16 %v402
        %v435 = vpack.c.b16 %v432, %v431
        %v436 = vpack.c.b16 %v434, %v433
        %vm437 = vcmask 261120
        %v439 = vsel %vm437, %v435, 0
        %v442 = vsel %vm437, %v436, 0
        %444 = vmatprep.subr.bf16.mxu0 0
        %445 = vmatpush1.bf16.msra.mxu0 %v397
        %446 = vmatprep.subr.bf16.mxu0 0
        %447 = vmatpush1.bf16.msra.mxu0 %v398
        %448 = vmatprep.subr.bf16.mxu0 0
        %449 = vmatpush1.bf16.msra.mxu0 0
        %450 = vmatprep.subr.bf16.mxu0 0
        %451 = vmatpush1.bf16.msra.mxu0 0
        %452 = vmatprep.subr.bf16.mxu0 0
        %453 = vmatpush1.bf16.msra.mxu0 0
        %454 = vmatprep.subr.bf16.mxu0 0
        %455 = vmatpush1.bf16.msra.mxu0 0
        %456 = vmatprep.subr.bf16.mxu0 0
        %457 = vmatpush1.bf16.msra.mxu0 0
        %458 = vmatprep.subr.bf16.mxu0 0
        %459 = vmatpush1.bf16.msra.mxu0 0
        %460 = vmatprep.subr.bf16.mxu0 0
        %461 = vmatpush1.bf16.msra.mxu0 0
        %462 = vmatprep.subr.bf16.mxu0 0
        %463 = vmatpush1.bf16.msra.mxu0 0
        %464 = vmatprep.subr.bf16.mxu0 0
        %465 = vmatpush1.bf16.msra.mxu0 0
        %466 = vmatprep.subr.bf16.mxu0 0
        %467 = vmatpush1.bf16.msra.mxu0 0
        %468 = vmatprep.subr.bf16.mxu0 0
        %469 = vmatpush1.bf16.msra.mxu0 0
        %470 = vmatprep.subr.bf16.mxu0 0
        %471 = vmatpush1.bf16.msra.mxu0 0
        %472 = vmatprep.subr.bf16.mxu0 0
        %473 = vmatpush1.bf16.msra.mxu0 0
        %474 = vmatprep.subr.bf16.mxu0 0
        %475 = vmatpush1.bf16.msra.mxu0 0
        %476 = vmatprep.mubr.bf16.mxu0 0
        %477 = vmatmul.mubr.bf16.gmra.mrb[0].mxu0 %v439
        %v478 = vpop.f32.mrb[0].mxu0
        %v479 = vadd.f32 %v410, %v478
        %v480 = vpop.f32.mrb[0].mxu0
        %v481 = vpop.f32.mrb[0].mxu0
        %v482 = vadd.f32 %v415, %v481
        %v483 = vpop.f32.mrb[0].mxu0
        %484 = vmatprep.mubr.bf16.mxu0 0
        %485 = vmatmul.mubr.bf16.gmra.mrb[0].mxu0 %v442
        %v486 = vpop.f32.mrb[0].mxu0
        %v487 = vadd.f32 %v420, %v486
        %v488 = vpop.f32.mrb[0].mxu0
        %v489 = vpop.f32.mrb[0].mxu0
        %v490 = vadd.f32 %v425, %v489
        %v491 = vpop.f32.mrb[0].mxu0
        %492 = vdwg.mxu0
        %v493 = vmul.f32 %v479, 0.2
        %v494 = vmul.f32 %v482, 0.2
        %v495 = vmul.f32 %v487, 0.2
        %v496 = vmul.f32 %v490, 0.2
        %v497 = vmax.f32 %v479, %v493
        %v498 = vmax.f32 %v482, %v494
        %v499 = vmax.f32 %v487, %v495
        %v500 = vmax.f32 %v490, %v496
        %v501 = vpack.c.bf16 %v498, %v497
        %v502 = vpack.c.bf16 %v500, %v499
        %v503 = vld [vmem:[%s4] sm:$0x1]
        %v504 = vld [vmem:[#allocation3] sm:$0x1]
        %506 = vset.pattern.permute.xlu0 0
        %507 = vperm.xlu0 %506, %v504
        %v508 = vpop.permute.xlu0 %507
        %v510 = vlaneseq
        %v511 = vshrl.u32 %v510, 7
        %v512 = vsub.s32 0, %v511
        %v513 = vrot.slane %v508, %v512
        %v515 = vsel %vm437, %v503, 0
        %517 = vmatprep.subr.bf16.mxu0 0
        %518 = vmatpush1.bf16.msra.mxu0 %v501
        %519 = vmatprep.subr.bf16.mxu0 0
        %520 = vmatpush1.bf16.msra.mxu0 %v502
        %521 = vmatprep.subr.bf16.mxu0 0
        %522 = vmatpush1.bf16.msra.mxu0 0
        %523 = vmatprep.subr.bf16.mxu0 0
        %524 = vmatpush1.bf16.msra.mxu0 0
        %525 = vmatprep.subr.bf16.mxu0 0
        %526 = vmatpush1.bf16.msra.mxu0 0
        %527 = vmatprep.subr.bf16.mxu0 0
        %528 = vmatpush1.bf16.msra.mxu0 0
        %529 = vmatprep.subr.bf16.mxu0 0
        %530 = vmatpush1.bf16.msra.mxu0 0
        %531 = vmatprep.subr.bf16.mxu0 0
        %532 = vmatpush1.bf16.msra.mxu0 0
        %533 = vmatprep.subr.bf16.mxu0 0
        %534 = vmatpush1.bf16.msra.mxu0 0
        %535 = vmatprep.subr.bf16.mxu0 0
        %536 = vmatpush1.bf16.msra.mxu0 0
        %537 = vmatprep.subr.bf16.mxu0 0
        %538 = vmatpush1.bf16.msra.mxu0 0
        %539 = vmatprep.subr.bf16.mxu0 0
        %540 = vmatpush1.bf16.msra.mxu0 0
        %541 = vmatprep.subr.bf16.mxu0 0
        %542 = vmatpush1.bf16.msra.mxu0 0
        %543 = vmatprep.subr.bf16.mxu0 0
        %544 = vmatpush1.bf16.msra.mxu0 0
        %545 = vmatprep.subr.bf16.mxu0 0
        %546 = vmatpush1.bf16.msra.mxu0 0
        %547 = vmatprep.subr.bf16.mxu0 0
        %548 = vmatpush1.bf16.msra.mxu0 0
        %549 = vmatprep.mubr.bf16.mxu0 0
        %550 = vmatmul.mubr.bf16.gmra.mrb[0].mxu0 %v515
        %v551 = vpop.f32.mrb[0].mxu0
        %v552 = vadd.f32 %v513, %v551
        %v553 = vpop.f32.mrb[0].mxu0
        %v554 = vpop.f32.mrb[0].mxu0
        %v555 = vpop.f32.mrb[0].mxu0
        %556 = vdwg.mxu0
        %v557 = vadd.f32 %v282, 1.0
        %v558 = vmul.f32 %v557, 0.5
        %v559 = vmax.f32 %v552, 0.0
        %v560 = vand.u32 2147483647, %v552
        %v561 = vsub.f32 0.0, %v560
        %v562 = vmul.f32 %v561, 1.442695
        %v563 = vpow.pop %v562
        %v564 = vadd.f32 %v563, 1.0
        %v565 = vlog2.pop %v564
        %v566 = vmul.f32 %v565, 0.6931472
        %v567 = vadd.f32 %v559, %v566
        %v569 = vrot.slane %v552, 6
        %v571 = vmul.f32 %v558, %v569
        %v573 = vrot.slane %v571, 2
        %v575 = vsub.f32 %v567, %v573
        %v576 = vld [vmem:[#allocation2] sm:$0x1]
        %vm577 = vcmask 1040384
        %v578 = vsel %vm577, %v575, 0.0
        %579 = vadd.xlane.f32.xlu0 %v578
        %v580 = vpop.xlane.xlu0 %579
        %v581 = vrot.slane %v580, 4
        %v582 = vadd.f32 %v580, %v581
        %v583 = vrot.slane %v582, 2
        %v584 = vadd.f32 %v582, %v583
        %v585 = vrot.slane %v584, 1
        %v586 = vadd.f32 %v584, %v585
        %s587 = vtos %v586
        %v588 = vstv %s587
        %v589 = vadd.f32 %v576, %v588
        %vm590 = vcmask 0
        %591 = vst.msk [vmem:[#allocation2] sm:$0x1] %vm590, %v589
        %s592 = smul.u32 %s26, 2
        %s593 = sadd.s32 %s592, %s27
        %s594 = sadd.s32 %s593, 1
        %s595 = smul.u32 %s594, 128
        %p596 = scmp.gt.s32.totalorder %s595, 450
        // Predicated region
        $region49: #{tpu_custom_call.1} parent=43 // pred_check
          %p597 = pneg %p596
        $region50: #{tpu_custom_call.1} parent=43 // pred_check_branch
          %599 = sbr.rel (%p597) target = $region52
        $region51: #{tpu_custom_call.1} parent=43 // pred_region
          %v600 = vlaneseq
          %v601 = vand.u32 %v600, 127
          %s602 = smul.u32 %s593, 128
          %v603 = vstv %s602
          %v604 = vadd.s32 %v603, %v601
          %vm605 = vcmp.ge.s32.totalorder %v604, 450
          %v606 = vld [vmem:[#allocation2] sm:$0x1]
          %v607 = vsel %vm605, %v575, 0.0
          %v608 = vsel %vm577, %v607, 0.0
          %609 = vadd.xlane.f32.xlu0 %v608
          %v610 = vpop.xlane.xlu0 %609
          %v611 = vrot.slane %v610, 4
          %v612 = vadd.f32 %v610, %v611
          %v613 = vrot.slane %v612, 2
          %v614 = vadd.f32 %v612, %v613
          %v615 = vrot.slane %v614, 1
          %v616 = vadd.f32 %v614, %v615
          %s617 = vtos %v616
          %v618 = vstv %s617
          %v619 = vsub.f32 %v606, %v618
          %620 = vst.msk [vmem:[#allocation2] sm:$0x1] %vm590, %v619
        $region52: #{tpu_custom_call.1} parent=43 // pred_fallthru
          _
        %p621 = scmp.eq.s32.totalorder %s27, 1
        // Predicated region
        $region53: #{tpu_custom_call.1} parent=43 // pred_check
          %p622 = pneg %p621
        $region54: #{tpu_custom_call.1} parent=43 // pred_check_branch
          %624 = sbr.rel (%p622) target = $region56
        $region55: #{tpu_custom_call.1} parent=43 // pred_region
          %v625 = vld [vmem:[#allocation2] sm:$0x1]
          %v627 = vlaneseq
          %v628 = vshrl.u32 %v627, 7
          %v629 = vsub.s32 0, %v628
          %v630 = vrot.slane %v625, %v629
          %631 = vset.pattern.permute.xlu0 0
          %632 = vperm.xlu0 %631, %v630
          %v633 = vpop.permute.xlu0 %632
          %635 = vst [vmem:[%s266] sm:$0xff] %v633
        $region56: #{tpu_custom_call.1} parent=43 // pred_fallthru
          _
        %s636 = sand.u32 %s177, 1
        %s637 = scalar_lea.sflag [#allocation5], %s636
        %s638 = sand.u32 %s177, 1
        %s639 = smul.addr %s638, 8
        %s640 = scalar_lea.vmem [#allocation4], %s639
        // Predicated region
        $region57: #{tpu_custom_call.1} parent=43 // pred_check
          %p641 = pneg %p187
        $region58: #{tpu_custom_call.1} parent=43 // pred_check_branch
          %643 = sbr.rel (%p641) target = $region60
        $region59: #{tpu_custom_call.1} parent=43 // pred_region
          %s645 = ssub.s32 128, 128
          %646 = vsyncadd %s637, %s645
          %s647 = smul.addr %s26, 128
          %s648 = scalar_lea.hbm %s6, %s647
          %s650 = sshll.u32 %s640, 4
          %s651 = int_to_ptr.vmem [resolvable:$true] %s650
          %653 = dma.vmem_to_hbm [thread:$0]  %s651, 128, %s648, %s637
        $region60: #{tpu_custom_call.1} parent=43 // pred_fallthru
          _
      $region44: #{tpu_custom_call.1} parent=5 // pred_fallthru
        _
      %p654 = scmp.le.s32.totalorder 2, %s17
      // Predicated region
      $region61: #{tpu_custom_call.1} parent=5 // pred_check
        %p655 = pneg %p654
      $region62: #{tpu_custom_call.1} parent=5 // pred_check_branch
        %657 = sbr.rel (%p655) target = $region64
      $region63: #{tpu_custom_call.1} parent=5 // pred_region
        %s658 = ssub.s32 %s17, 2
        // Predicated region
        $region65: #{tpu_custom_call.1} parent=63 // pred_check
          %p659 = pneg %p193
        $region66: #{tpu_custom_call.1} parent=63 // pred_check_branch
          %661 = sbr.rel (%p659) target = $region68
        $region67: #{tpu_custom_call.1} parent=63 // pred_region
          %s662 = sand.u32 %s178, 1
          %s663 = scalar_lea.sflag [#allocation5], %s662
          %s664 = sand.u32 %s178, 1
          %s665 = smul.addr %s664, 8
          %s666 = scalar_lea.vmem [#allocation4], %s665
          %667 = dma.done %s663, 128
        $region68: #{tpu_custom_call.1} parent=63 // pred_fallthru
          _
      $region64: #{tpu_custom_call.1} parent=5 // pred_fallthru
        _
    $region6: #{tpu_custom_call.1} parent=1 // loop_footer
      %s21 = sadd.s32 1, %s17
    $region7: #{tpu_custom_call.1} parent=1 // loop_footer_branch
      %16 = sbr.rel target = $region3
    $region8: #{tpu_custom_call.1} parent=1 // loop_exit
      _
    %668 = vsyncpa [#allocation5], 1
    %s669 = scalar_lea.sflag [#allocation5], 1
    %670 = vsyncpa %s669, 1

</llo_original>
